<compile_context>
chip_gen: v5e
topology: v5e:2x2
jax: 0.10.0
libtpu: 0.0.40
codegen_flags: <defaults>
</compile_context>

<pallas_src>
import math

import jax
import jax.numpy as jnp
import numpy as np
from jax import lax
from jax.experimental import pallas as pl
from jax.experimental.pallas import tpu as pltpu


def _tpu_budget():
    """Return (target_block_bytes_per_stream, vmem_limit_bytes).

    v5e / v6e / v5p have 128 MiB of VMEM per TensorCore -> ~4 MiB blocks under
    a 96 MiB scoped limit.  v7x has only 64 MiB per TC (v4 / unknown parts are
    treated the same, conservatively) -> ~2 MiB blocks under a 48 MiB limit.
    6 big streams x 2 pipeline buffers plus the in-kernel f32 temporaries stay
    well inside either budget.
    """
    vmem = None
    try:
        vmem = getattr(pltpu.get_tpu_info(), "vmem_capacity_bytes", None)
    except Exception:
        vmem = None
    if vmem is None:
        try:
            kind = jax.devices()[0].device_kind.lower()
            if "v5" in kind or "v6" in kind:
                vmem = 128 * 1024 * 1024
        except Exception:
            vmem = None
    if vmem is not None and vmem >= 100 * 1024 * 1024:
        return 4 * 1024 * 1024, 96 * 1024 * 1024
    return 2 * 1024 * 1024, 48 * 1024 * 1024


def _row_align(*dtypes):
    """Row-tile alignment: 8 for 32-bit streams, 16 for bf16, 32 for 8-bit."""
    a = 8
    for dt in dtypes:
        isz = jnp.dtype(dt).itemsize
        if isz < 4:
            a = max(a, (4 // isz) * 8)
    return a


def _choose_row_tile(num_rows, row_len, *, target_block_bytes, align=8,
                     elem_bytes=4):
    """Row tile: aligned multiple (or full extent), sized to ~target bytes per
    f32 output stream, capped at ~num_rows/2 so the grid keeps >= 2 steps
    (both v7x TensorCores stay busy)."""
    if num_rows <= align:
        return num_rows                      # full extent (always legal)
    cap = max(align, (target_block_bytes // (row_len * elem_bytes)) // align * align)
    half = max(align, (num_rows // 2) // align * align)
    tile = min(cap, half)
    if num_rows % tile == 0:
        return tile
    # Accept a smaller exact divisor only if it keeps blocks within 2x of the
    # target; otherwise keep `tile` and let Pallas handle the ragged tail
    # (elementwise semantics make the masked / revisited tail harmless).
    for tt in range(tile - align, tile // 2 - 1, -align):
        if tt >= align and num_rows % tt == 0:
            return tt
    return tile


def _make_kernel(d_model, group, max_seq_len, out_dtype):
    """Kernel body for (Tt, L) blocks with L = group * d_model lanes."""
    D = d_model
    g = group
    L = g * D
    scale = float(math.sqrt(D))
    neg_log_msl = float(-math.log(float(max_seq_len)))
    half_pi = float(np.pi / 2.0)
    d_log2 = D.bit_length() - 1      # used only when g > 1 (D is a power of 2)

    def kernel(x_ref, m_ref, delta_ref, t_ref, xo_ref, mo_ref, do_ref):
        # Per-lane constants rebuilt from an iota each grid step: tiny (1, L)
        # vectors, so no inv_freq/phase HBM input streams or extra buffers.
        lane = lax.broadcasted_iota(jnp.int32, (1, L), 1)
        j = (lane & (D - 1)) if g > 1 else lane      # feature index in d_model
        expo = (j >> 1).astype(jnp.float32) * (2.0 / D)
        inv_freq = jnp.exp(expo * neg_log_msl)       # max_seq_len ** (-expo)
        phase = jnp.where((j & 1) == 0, 0.0, half_pi).astype(jnp.float32)

        t_blk = t_ref[...].astype(jnp.float32)       # (Tt, g)
        if g > 1:
            # Lane-expand t on the (otherwise idle) MXU with a one-hot
            # (Tt, g) @ (g, L) matmul instead of g-1 full-tile VPU selects.
            # t is split into bf16 hi/lo parts so the MXU's native bf16 path
            # reconstructs it to ~1.5e-5 relative (exactly when t fits bf16);
            # the 0/1 one-hot is exact in bf16.
            grp = lane >> d_log2                     # (1, L): lane -> time slot
            sel = lax.broadcasted_iota(jnp.int32, (g, L), 0)
            onehot = (sel == grp).astype(jnp.bfloat16)           # (g, L)
            t_hi = t_blk.astype(jnp.bfloat16)
            t_lo = (t_blk - t_hi.astype(jnp.float32)).astype(jnp.bfloat16)
            t_lane = (jnp.dot(t_hi, onehot, preferred_element_type=jnp.float32)
                      + jnp.dot(t_lo, onehot, preferred_element_type=jnp.float32))
        else:
            t_lane = t_blk                           # (Tt, 1), lane-broadcasts

        # Single lane-dense transcendental: sin(a + pi/2) == cos(a).
        pos = jnp.sin(t_lane * inv_freq + phase)     # (Tt, L) float32

        # Inputs arrive in their native dtype; upcast here (free VPU work).
        s = jnp.float32(scale)
        xo_ref[...] = (x_ref[...].astype(jnp.float32) * s + pos).astype(out_dtype)
        mo_ref[...] = (m_ref[...].astype(jnp.float32) * s + pos).astype(out_dtype)
        do_ref[...] = (delta_ref[...].astype(jnp.float32) * s + pos).astype(out_dtype)

    return kernel


def positional_encoder_time_descriptor(x, m, delta, t, *, d_model, max_seq_len,
                                       out_dtype=jnp.float32):
    """x, m, delta: [B, T, D] (any float/int dtype); t: [B, T].

    Returns (x', m', delta') in `out_dtype` (float32 by default, matching the
    PyTorch module; pass jnp.bfloat16 to halve output write traffic when the
    downstream numerics allow it).
    """
    B, T, D = x.shape
    assert D == d_model and T == max_seq_len
    assert m.shape == x.shape and delta.shape == x.shape and t.shape == (B, T)

    n_rows = B * T
    # Fold g consecutive time steps into the lane axis when d_model < 128 so
    # the last (lane) dim is a multiple of 128 -> unmasked stores / full vregs.
    g = 1
    if D % 128 != 0 and 128 % D == 0:
        cand = 128 // D
        if cand <= 32 and n_rows % cand == 0:
            g = cand
    L = g * D
    R = n_rows // g

    # Row-major reshapes (no data reorder).
    # TODO(synk): verify in HLO that these lower to bitcasts (not relayout
    # copies) for the D<128 folded path; if copies appear, consume (B*T, D)
    # directly (masked stores) or adopt the packed (R, 128) shape end-to-end.
    x2 = x.reshape(R, L)
    m2 = m.reshape(R, L)
    d2 = delta.reshape(R, L)
    t2 = t.reshape(R, g)

    target_block_bytes, vmem_limit = _tpu_budget()
    align = _row_align(x.dtype, m.dtype, delta.dtype, t.dtype, out_dtype)
    tile_rows = _choose_row_tile(R, L, target_block_bytes=target_block_bytes,
                                 align=align)
    grid = (pl.cdiv(R, tile_rows),)

    row_spec = pl.BlockSpec((tile_rows, L), lambda i: (i, 0))
    t_spec = pl.BlockSpec((tile_rows, g), lambda i: (i, 0))
    out_sds = jax.ShapeDtypeStruct((R, L), out_dtype)

    kernel = _make_kernel(D, g, max_seq_len, out_dtype)

    xo, mo, do = pl.pallas_call(
        kernel,
        out_shape=(out_sds, out_sds, out_sds),
        grid_spec=pltpu.PrefetchScalarGridSpec(
            num_scalar_prefetch=0,
            grid=grid,
            in_specs=[row_spec, row_spec, row_spec, t_spec],
            out_specs=[row_spec, row_spec, row_spec],
        ),
        compiler_params=pltpu.CompilerParams(
            dimension_semantics=("parallel",),
            vmem_limit_bytes=vmem_limit,
        ),
    )(x2, m2, d2, t2)

    return (xo.reshape(B, T, D), mo.reshape(B, T, D), do.reshape(B, T, D))


def _reference_numpy(x, m, delta, t, d_model, max_seq_len):
    """Pure-numpy float64 port of the PyTorch forward (np.power/np.sin table)."""
    x64, m64, d64, t64 = (np.asarray(a).astype(np.float64)
                          for a in (x, m, delta, t))
    B, T, D = x64.shape
    table = np.empty((B, D, T), np.float64)
    for j in range(D):
        table[:, j, :] = t64 / np.power(max_seq_len, 2 * (j // 2) / d_model)
    table[:, 0::2, :] = np.sin(table[:, 0::2, :])
    table[:, 1::2, :] = np.cos(table[:, 1::2, :])
    pos = np.transpose(table, (0, 2, 1))
    s = math.sqrt(d_model)
    return tuple((a * s + pos).astype(np.float32) for a in (x64, m64, d64))


if __name__ == "__main__":
    def _run_case(B, max_seq_len, d_model, in_dtype=jnp.float32,
                  bf16_exact_t=True, atol=2e-5):
        key = jax.random.PRNGKey(0)
        kx, km, kd, kt = jax.random.split(key, 4)
        x = jax.random.normal(kx, (B, max_seq_len, d_model),
                              dtype=jnp.float32).astype(in_dtype)
        m = (jax.random.uniform(km, (B, max_seq_len, d_model)) > 0.5).astype(in_dtype)
        delta = jax.random.uniform(kd, (B, max_seq_len, d_model),
                                   dtype=jnp.float32).astype(in_dtype)
        u = jax.random.uniform(kt, (B, max_seq_len), dtype=jnp.float32)
        if bf16_exact_t:
            # Time stamps on a 1/8 grid (exact in bf16) -> the MXU one-hot
            # expansion on the folded path is bit-exact, so the tolerance
            # below only measures f32-vs-f64 elementwise error.
            t = jnp.floor(u * (max_seq_len * 8.0)) / 8.0
        else:
            t = u * max_seq_len

        outs = positional_encoder_time_descriptor(
            x, m, delta, t, d_model=d_model, max_seq_len=max_seq_len)
        jax.block_until_ready(outs)

        refs = _reference_numpy(x, m, delta, t, d_model, max_seq_len)
        for got, want in zip(outs, refs):
            np.testing.assert_allclose(np.asarray(got), want, rtol=1e-5, atol=atol)

    # Small shapes consistent with the module.
    _run_case(B=2, max_seq_len=8, d_model=32)                       # folded path (g=4), MXU t-expand
    _run_case(B=2, max_seq_len=8, d_model=128, bf16_exact_t=False)  # g=1 path (d_model already 128)
    _run_case(B=2, max_seq_len=8, d_model=32, in_dtype=jnp.bfloat16,
              atol=1e-4)                                            # native bf16 input streams
    print("KERNEL_OK")
</pallas_src>

<mosaic_0001>
module attributes {stable_mosaic.version = 11 : i64} {
  func.func @kernel(%arg0: i32, %arg1: memref<4x128xf32, #tpu.memory_space<vmem>>, %arg2: memref<4x128xf32, #tpu.memory_space<vmem>>, %arg3: memref<4x128xf32, #tpu.memory_space<vmem>>, %arg4: memref<4x4xf32, #tpu.memory_space<vmem>>, %arg5: memref<4x128xf32, #tpu.memory_space<vmem>>, %arg6: memref<4x128xf32, #tpu.memory_space<vmem>>, %arg7: memref<4x128xf32, #tpu.memory_space<vmem>>) attributes {dimension_semantics = [#tpu.dimension_semantics<parallel>], iteration_bounds = array<i64: 1>, scalar_prefetch = 0 : i64, scratch_operands = 0 : i64, tpu.core_type = #tpu.core_type<tc>, window_params = [{transform_indices = @transform_0, window_bounds = array<i64: 4, 128>}, {transform_indices = @transform_1, window_bounds = array<i64: 4, 128>}, {transform_indices = @transform_2, window_bounds = array<i64: 4, 128>}, {transform_indices = @transform_3, window_bounds = array<i64: 4, 4>}, {transform_indices = @transform_4, window_bounds = array<i64: 4, 128>}, {transform_indices = @transform_5, window_bounds = array<i64: 4, 128>}, {transform_indices = @transform_6, window_bounds = array<i64: 4, 128>}]} {
    %0 = tpu.iota {dimensions = array<i32: 1>} : vector<1x128xi32>
    %c31_i32 = arith.constant 31 : i32
    %1 = vector.broadcast %c31_i32 : i32 to vector<1x128xi32>
    %2 = arith.andi %0, %1 : vector<1x128xi32>
    %c1_i32 = arith.constant 1 : i32
    %3 = vector.broadcast %c1_i32 : i32 to vector<1x128xi32>
    %4 = arith.shrsi %2, %3 : vector<1x128xi32>
    %5 = arith.sitofp %4 : vector<1x128xi32> to vector<1x128xf32>
    %cst = arith.constant 6.250000e-02 : f32
    %6 = vector.broadcast %cst : f32 to vector<1x128xf32>
    %7 = arith.mulf %5, %6 : vector<1x128xf32>
    %cst_0 = arith.constant -2.07944155 : f32
    %8 = vector.broadcast %cst_0 : f32 to vector<1x128xf32>
    %9 = arith.mulf %7, %8 : vector<1x128xf32>
    %10 = math.exp %9 : vector<1x128xf32>
    %c1_i32_1 = arith.constant 1 : i32
    %11 = vector.broadcast %c1_i32_1 : i32 to vector<1x128xi32>
    %12 = arith.andi %2, %11 : vector<1x128xi32>
    %c0_i32 = arith.constant 0 : i32
    %13 = vector.broadcast %c0_i32 : i32 to vector<1x128xi32>
    %14 = arith.cmpi eq, %12, %13 : vector<1x128xi32>
    %cst_2 = arith.constant 0.000000e+00 : f32
    %cst_3 = arith.constant 1.57079637 : f32
    %15 = vector.broadcast %cst_2 : f32 to vector<1x128xf32>
    %16 = vector.broadcast %cst_3 : f32 to vector<1x128xf32>
    %17 = arith.select %14, %15, %16 : vector<1x128xi1>, vector<1x128xf32>
    %c0 = arith.constant 0 : index
    %c0_4 = arith.constant 0 : index
    %18 = vector.load %arg4[%c0, %c0_4] : memref<4x4xf32, #tpu.memory_space<vmem>>, vector<4x4xf32>
    %c5_i32 = arith.constant 5 : i32
    %19 = vector.broadcast %c5_i32 : i32 to vector<1x128xi32>
    %20 = arith.shrsi %0, %19 : vector<1x128xi32>
    %21 = tpu.iota {dimensions = array<i32: 0>} : vector<4x128xi32>
    %22 = vector.broadcast %20 : vector<1x128xi32> to vector<4x128xi32>
    %23 = arith.cmpi eq, %21, %22 : vector<4x128xi32>
    %24 = arith.extui %23 : vector<4x128xi1> to vector<4x128xi32>
    %25 = arith.sitofp %24 : vector<4x128xi32> to vector<4x128xf32>
    %26 = arith.truncf %25 : vector<4x128xf32> to vector<4x128xbf16>
    %27 = arith.truncf %18 : vector<4x4xf32> to vector<4x4xbf16>
    %28 = arith.extf %27 : vector<4x4xbf16> to vector<4x4xf32>
    %29 = arith.subf %18, %28 : vector<4x4xf32>
    %30 = arith.truncf %29 : vector<4x4xf32> to vector<4x4xbf16>
    %cst_5 = arith.constant dense<0.000000e+00> : vector<4x128xf32>
    %31 = tpu.matmul %27, %26, %cst_5 {dimension_numbers = #tpu.dot_dimension_numbers<[1], [0], [0], [1], [0, 0, 1, 1], [], []>} : vector<4x4xbf16>, vector<4x128xbf16>, vector<4x128xf32> -> vector<4x128xf32>
    %cst_6 = arith.constant dense<0.000000e+00> : vector<4x128xf32>
    %32 = tpu.matmul %30, %26, %cst_6 {dimension_numbers = #tpu.dot_dimension_numbers<[1], [0], [0], [1], [0, 0, 1, 1], [], []>} : vector<4x4xbf16>, vector<4x128xbf16>, vector<4x128xf32> -> vector<4x128xf32>
    %33 = arith.addf %31, %32 : vector<4x128xf32>
    %34 = vector.broadcast %10 : vector<1x128xf32> to vector<4x128xf32>
    %35 = arith.mulf %33, %34 : vector<4x128xf32>
    %36 = vector.broadcast %17 : vector<1x128xf32> to vector<4x128xf32>
    %37 = arith.addf %35, %36 : vector<4x128xf32>
    %38 = math.sin %37 : vector<4x128xf32>
    %c0_7 = arith.constant 0 : index
    %c0_8 = arith.constant 0 : index
    %39 = vector.load %arg1[%c0_7, %c0_8] : memref<4x128xf32, #tpu.memory_space<vmem>>, vector<4x128xf32>
    %cst_9 = arith.constant 5.65685415 : f32
    %40 = vector.broadcast %cst_9 : f32 to vector<4x128xf32>
    %41 = arith.mulf %39, %40 : vector<4x128xf32>
    %42 = arith.addf %41, %38 : vector<4x128xf32>
    %c0_10 = arith.constant 0 : index
    %c0_11 = arith.constant 0 : index
    %43 = vector.load %arg5[%c0_10, %c0_11] : memref<4x128xf32, #tpu.memory_space<vmem>>, vector<4x128xf32>
    tpu.vector_store %arg5[%c0_10, %c0_11], %42 {strides = array<i32>} : memref<4x128xf32, #tpu.memory_space<vmem>>, vector<4x128xf32>,
    %c0_12 = arith.constant 0 : index
    %c0_13 = arith.constant 0 : index
    %44 = vector.load %arg2[%c0_12, %c0_13] : memref<4x128xf32, #tpu.memory_space<vmem>>, vector<4x128xf32>
    %cst_14 = arith.constant 5.65685415 : f32
    %45 = vector.broadcast %cst_14 : f32 to vector<4x128xf32>
    %46 = arith.mulf %44, %45 : vector<4x128xf32>
    %47 = arith.addf %46, %38 : vector<4x128xf32>
    %c0_15 = arith.constant 0 : index
    %c0_16 = arith.constant 0 : index
    %48 = vector.load %arg6[%c0_15, %c0_16] : memref<4x128xf32, #tpu.memory_space<vmem>>, vector<4x128xf32>
    tpu.vector_store %arg6[%c0_15, %c0_16], %47 {strides = array<i32>} : memref<4x128xf32, #tpu.memory_space<vmem>>, vector<4x128xf32>,
    %c0_17 = arith.constant 0 : index
    %c0_18 = arith.constant 0 : index
    %49 = vector.load %arg3[%c0_17, %c0_18] : memref<4x128xf32, #tpu.memory_space<vmem>>, vector<4x128xf32>
    %cst_19 = arith.constant 5.65685415 : f32
    %50 = vector.broadcast %cst_19 : f32 to vector<4x128xf32>
    %51 = arith.mulf %49, %50 : vector<4x128xf32>
    %52 = arith.addf %51, %38 : vector<4x128xf32>
    %c0_20 = arith.constant 0 : index
    %c0_21 = arith.constant 0 : index
    %53 = vector.load %arg7[%c0_20, %c0_21] : memref<4x128xf32, #tpu.memory_space<vmem>>, vector<4x128xf32>
    tpu.vector_store %arg7[%c0_20, %c0_21], %52 {strides = array<i32>} : memref<4x128xf32, #tpu.memory_space<vmem>>, vector<4x128xf32>,
    return
  }
  func.func @transform_0(%arg0: i32) -> (i32, i32) {
    %c0_i32 = arith.constant 0 : i32
    %c0_i32_0 = arith.constant 0 : i32
    return %arg0, %c0_i32 : i32, i32
  }
  func.func @transform_1(%arg0: i32) -> (i32, i32) {
    %c0_i32 = arith.constant 0 : i32
    %c0_i32_0 = arith.constant 0 : i32
    return %arg0, %c0_i32 : i32, i32
  }
  func.func @transform_2(%arg0: i32) -> (i32, i32) {
    %c0_i32 = arith.constant 0 : i32
    %c0_i32_0 = arith.constant 0 : i32
    return %arg0, %c0_i32 : i32, i32
  }
  func.func @transform_3(%arg0: i32) -> (i32, i32) {
    %c0_i32 = arith.constant 0 : i32
    %c0_i32_0 = arith.constant 0 : i32
    return %arg0, %c0_i32 : i32, i32
  }
  func.func @transform_4(%arg0: i32) -> (i32, i32) {
    %c0_i32 = arith.constant 0 : i32
    %c0_i32_0 = arith.constant 0 : i32
    return %arg0, %c0_i32 : i32, i32
  }
  func.func @transform_5(%arg0: i32) -> (i32, i32) {
    %c0_i32 = arith.constant 0 : i32
    %c0_i32_0 = arith.constant 0 : i32
    return %arg0, %c0_i32 : i32, i32
  }
  func.func @transform_6(%arg0: i32) -> (i32, i32) {
    %c0_i32 = arith.constant 0 : i32
    %c0_i32_0 = arith.constant 0 : i32
    return %arg0, %c0_i32 : i32, i32
  }
}

</mosaic_0001>

<llo_original>
// kernel: tpu_custom_call.1
$region0: #{tpu_custom_call.1}
  #allocation0 [shape = 'u32[]', space=smem, size = 0x4, offset = 0x4, fixed_abs, tag = 'smem constant byte address 0x4 - core index']
  #allocation1 [shape = 'u32[72,128]{1,0:T(1,128)}', space=vmem, size = 0x9000, scoped, tag = 'internal scratch']
  %s0 = inlined_call_operand.hbm [shape: f32[4,128], index: 0, kind: input, shape index: {}]
  %s1 = inlined_call_operand.hbm [shape: f32[4,128], index: 1, kind: input, shape index: {}]
  %s2 = inlined_call_operand.hbm [shape: f32[4,128], index: 2, kind: input, shape index: {}]
  %s3 = inlined_call_operand.hbm [shape: f32[4,4], index: 3, kind: input, shape index: {}]
  %s4 = inlined_call_operand.hbm [shape: f32[4,128], index: 4, kind: output, shape index: {0}]
  %s5 = inlined_call_operand.hbm [shape: f32[4,128], index: 5, kind: output, shape index: {1}]
  %s6 = inlined_call_operand.hbm [shape: f32[4,128], index: 6, kind: output, shape index: {2}]
  %7 = xla_tuple %s4, %s5, %s6
  %s8 = sld [smem:[#allocation0]]
  $region58: #{tpu_custom_call.1} parent=0
    _
  %s10 = ssub.s32 1, %s8
  %s11 = scalar_select 0, %s10, %s8
  $region1: #{tpu_custom_call.1} parent=0
    #allocation2 [shape = 'u8[2048]{0}', space=vmem, size = 0x800, scoped, tag = 'input window, operand 0, single buffered']
    #allocation3 [shape = 's32[1]{0}', space=sflag, size = 0x4, scoped, tag = 'scoped memory for tpu_custom_call.1']
    #allocation4 [shape = 's32[1]{0}', space=sflag, size = 0x4, scoped, tag = 'scoped memory for tpu_custom_call.1']
    #allocation5 [shape = 'u8[2048]{0}', space=vmem, size = 0x800, scoped, tag = 'input window, operand 1, single buffered']
    #allocation6 [shape = 's32[1]{0}', space=sflag, size = 0x4, scoped, tag = 'scoped memory for tpu_custom_call.1']
    #allocation7 [shape = 'u8[2048]{0}', space=vmem, size = 0x800, scoped, tag = 'input window, operand 2, single buffered']
    #allocation8 [shape = 'u8[2048]{0}', space=vmem, size = 0x800, scoped, tag = 'input window, operand 3, single buffered']
    #allocation9 [shape = 's32[1]{0}', space=sflag, size = 0x4, scoped, tag = 'scoped memory for tpu_custom_call.1']
    #allocation10 [shape = 'u8[2048]{0}', space=vmem, size = 0x800, scoped, tag = 'output window, operand 0, single buffered']
    #allocation11 [shape = 'u8[2048]{0}', space=vmem, size = 0x800, scoped, tag = 'output window, operand 1, single buffered']
    #allocation12 [shape = 's32[1]{0}', space=sflag, size = 0x4, scoped, tag = 'scoped memory for tpu_custom_call.1']
    #allocation13 [shape = 'u8[2048]{0}', space=vmem, size = 0x800, scoped, tag = 'output window, operand 2, single buffered']
    %12 = vsyncpa [#allocation3], 0
    %13 = vsyncpa [#allocation6], 0
    %14 = vsyncpa [#allocation9], 0
    %15 = vsyncpa [#allocation4], 0
    %16 = vsyncpa [#allocation12], 0
    // Predicated region
    $region2: #{tpu_custom_call.1} parent=1 // pred_check
      _
    $region3: #{tpu_custom_call.1} parent=1 // pred_check_branch
      %18 = sbr.rel (0) target = $region5
    $region4: #{tpu_custom_call.1} parent=1 // pred_region
      %20 = vsyncadd [#allocation3], 0
      %s22 = sshll.u32 %s0, 4
      %s23 = int_to_ptr.hbm [resolvable:$true] %s22
      %s24 = sshll.u32 [#allocation2], 4
      %s25 = int_to_ptr.vmem [resolvable:$true] %s24
      %27 = dma.hbm_to_vmem [thread:$0]  %s23, 64, %s25, [#allocation3]
    $region5: #{tpu_custom_call.1} parent=1 // pred_fallthru
      _
    // Predicated region
    $region6: #{tpu_custom_call.1} parent=1 // pred_check
      _
    $region7: #{tpu_custom_call.1} parent=1 // pred_check_branch
      %29 = sbr.rel (0) target = $region9
    $region8: #{tpu_custom_call.1} parent=1 // pred_region
      %31 = vsyncadd [#allocation6], 0
      %s33 = sshll.u32 %s1, 4
      %s34 = int_to_ptr.hbm [resolvable:$true] %s33
      %s35 = sshll.u32 [#allocation5], 4
      %s36 = int_to_ptr.vmem [resolvable:$true] %s35
      %38 = dma.hbm_to_vmem [thread:$0]  %s34, 64, %s36, [#allocation6]
    $region9: #{tpu_custom_call.1} parent=1 // pred_fallthru
      _
    // Predicated region
    $region10: #{tpu_custom_call.1} parent=1 // pred_check
      _
    $region11: #{tpu_custom_call.1} parent=1 // pred_check_branch
      %40 = sbr.rel (0) target = $region13
    $region12: #{tpu_custom_call.1} parent=1 // pred_region
      %42 = vsyncadd [#allocation6], 0
      %s44 = sshll.u32 %s2, 4
      %s45 = int_to_ptr.hbm [resolvable:$true] %s44
      %s46 = sshll.u32 [#allocation7], 4
      %s47 = int_to_ptr.vmem [resolvable:$true] %s46
      %49 = dma.hbm_to_vmem [thread:$0]  %s45, 64, %s47, [#allocation6]
    $region13: #{tpu_custom_call.1} parent=1 // pred_fallthru
      _
    // Predicated region
    $region14: #{tpu_custom_call.1} parent=1 // pred_check
      _
    $region15: #{tpu_custom_call.1} parent=1 // pred_check_branch
      %51 = sbr.rel (0) target = $region17
    $region16: #{tpu_custom_call.1} parent=1 // pred_region
      %53 = vsyncadd [#allocation9], 0
      %s55 = sshll.u32 %s3, 4
      %s56 = int_to_ptr.hbm [resolvable:$true] %s55
      %s57 = sshll.u32 [#allocation8], 4
      %s58 = int_to_ptr.vmem [resolvable:$true] %s57
      %60 = dma.hbm_to_vmem [thread:$0]  %s56, 64, %s58, [#allocation9]
    $region17: #{tpu_custom_call.1} parent=1 // pred_fallthru
      _
    // Predicated region
    $region18: #{tpu_custom_call.1} parent=1 // pred_check
      _
    $region19: #{tpu_custom_call.1} parent=1 // pred_check_branch
      %62 = sbr.rel (0) target = $region21
    $region20: #{tpu_custom_call.1} parent=1 // pred_region
      %64 = dma.done [#allocation3], 64
    $region21: #{tpu_custom_call.1} parent=1 // pred_fallthru
      _
    // Predicated region
    $region22: #{tpu_custom_call.1} parent=1 // pred_check
      _
    $region23: #{tpu_custom_call.1} parent=1 // pred_check_branch
      %66 = sbr.rel (0) target = $region25
    $region24: #{tpu_custom_call.1} parent=1 // pred_region
      %68 = dma.done [#allocation6], 64
    $region25: #{tpu_custom_call.1} parent=1 // pred_fallthru
      _
    // Predicated region
    $region26: #{tpu_custom_call.1} parent=1 // pred_check
      _
    $region27: #{tpu_custom_call.1} parent=1 // pred_check_branch
      %70 = sbr.rel (0) target = $region29
    $region28: #{tpu_custom_call.1} parent=1 // pred_region
      %72 = dma.done [#allocation6], 64
    $region29: #{tpu_custom_call.1} parent=1 // pred_fallthru
      _
    // Predicated region
    $region30: #{tpu_custom_call.1} parent=1 // pred_check
      _
    $region31: #{tpu_custom_call.1} parent=1 // pred_check_branch
      %74 = sbr.rel (0) target = $region33
    $region32: #{tpu_custom_call.1} parent=1 // pred_region
      %76 = dma.done [#allocation9], 64
    $region33: #{tpu_custom_call.1} parent=1 // pred_fallthru
      _
    %v78 = vlaneseq
    %v79 = vand.u32 %v78, 127
    %v80 = vand.u32 %v79, 31
    %v81 = vshra.s32 %v80, 1
    %v82 = vcvt.s32.f32 %v81
    %v83 = vmul.f32 %v82, 0.0625
    %v84 = vmul.f32 %v83, -2.0794415
    %v85 = vmul.f32 %v84, 1.442695
    %v86 = vpow.pop %v85
    %v87 = vand.u32 %v80, 1
    %vm88 = vcmp.eq.s32.totalorder %v87, 0
    %v89 = vsel %vm88, 0.0, 1.5707964
    %v90 = vld [vmem:[#allocation8] sm:$0xf]
    %v91 = vshra.s32 %v79, 5
    %v92 = vlaneseq
    %v93 = vshrl.u32 %v92, 7
    %vm94 = vcmp.eq.s32.totalorder %v93, %v91
    %v95 = vsel %vm94, 1, 0
    %v96 = vcvt.s32.f32 %v95
    %v97 = vpack.c.bf16 %v96, %v96
    %v98 = vpack.c.bf16 %v90, %v90
    %v99 = vunpack.c.l.bf16 %v98
    %v100 = vsub.f32 %v90, %v99
    %v101 = vpack.c.bf16 %v100, %v100
    %vm102 = vcmask 31744
    %v104 = vsel %vm102, %v101, 0
    %vm106 = vcmask 1041408
    %v108 = vsel %vm106, %v97, 0
    %110 = vmatpush.bf16.msra.mxu0 0
    %111 = vmatpush.bf16.msra.mxu0 0
    %112 = vmatpush.bf16.msra.mxu0 0
    %113 = vmatpush.bf16.msra.mxu0 0
    %114 = vmatpush.bf16.msra.mxu0 0
    %115 = vmatpush.bf16.msra.mxu0 0
    %116 = vmatpush.bf16.msra.mxu0 0
    %117 = vmatpush.bf16.msra.mxu0 %v108
    %118 = vmatmul.bf16.gmra.mxu0 %v104
    %v119 = vpop.f32.mrf.mxu0
    %v120 = vadd.f32 0.0, %v119
    %v121 = vpop.f32.mrf.mxu0
    %122 = vdwg.mxu0
    %v124 = vsel %vm102, %v98, 0
    %126 = vmatpush.bf16.msra.mxu0 0
    %127 = vmatpush.bf16.msra.mxu0 0
    %128 = vmatpush.bf16.msra.mxu0 0
    %129 = vmatpush.bf16.msra.mxu0 0
    %130 = vmatpush.bf16.msra.mxu0 0
    %131 = vmatpush.bf16.msra.mxu0 0
    %132 = vmatpush.bf16.msra.mxu0 0
    %133 = vmatpush.bf16.msra.mxu0 %v108
    %134 = vmatmul.bf16.gmra.mxu0 %v124
    %v135 = vpop.f32.mrf.mxu0
    %v136 = vadd.f32 %v120, %v135
    %v137 = vpop.f32.mrf.mxu0
    %138 = vdwg.mxu0
    %v139 = vmul.f32 %v136, %v86
    %v140 = vadd.f32 %v139, %v89
    %v141 = vand.u32 2147483647, %v140
    %vm142 = vcmp.le.f32.partialorder %v141, 0.7853982
    %vm143 = vcmp.lt.s32.totalorder %v140, 0
    %v144 = vand.u32 %v140, 2139095040
    %v145 = vshrl.u32 %v144, 23
    %v146 = vsub.s32 %v145, 127
    %v147 = vand.u32 2147483647, %v140
    %v148 = vand.u32 %v147, 8388607
    %v149 = vor.u32 %v148, 8388608
    %v150 = vsub.s32 0, %v149
    %v151 = vadd.s32 %v146, 1
    %vm152 = vcmp.gt.s32.totalorder %v151, 0
    %v153 = vsel %vm152, %v151, 0
    %v154 = vshrl.u32 %v153, 5
    %v155 = vand.u32 %v153, 31
    %v156 = vsub.s32 32, %v155
    %v157 = vshrl.u32 683565275, %v156
    %v158 = vshll.u32 683565275, %v155
    %v159 = vshrl.u32 2475754826, %v156
    %v160 = vor.u32 %v158, %v159
    %v161 = vshll.u32 2475754826, %v155
    %v162 = vshrl.u32 2131351028, %v156
    %v163 = vor.u32 %v161, %v162
    %v164 = vshll.u32 2131351028, %v155
    %v165 = vshrl.u32 2102212464, %v156
    %v166 = vor.u32 %v164, %v165
    %v167 = vshll.u32 2102212464, %v155
    %v168 = vshrl.u32 920167782, %v156
    %v169 = vor.u32 %v167, %v168
    %v170 = vshll.u32 920167782, %v155
    %v171 = vshrl.u32 1326507024, %v156
    %v172 = vor.u32 %v170, %v171
    %vm173 = vcmp.lt.s32.totalorder %v154, 1
    %vm174 = vcmp.lt.s32.totalorder %v154, 2
    %vm175 = vcmp.lt.s32.totalorder %v154, 3
    %vm176 = vcmp.lt.s32.totalorder %v154, 4
    %v177 = vsel %vm173, %v157, %v160
    %v178 = vsel %vm176, %v166, 2102212464
    %v179 = vsel %vm175, %v163, %v178
    %v180 = vsel %vm174, %v177, %v179
    %v181 = vsel %vm173, %v160, %v163
    %v182 = vsel %vm176, %v169, 920167782
    %v183 = vsel %vm175, %v166, %v182
    %v184 = vsel %vm174, %v181, %v183
    %v185 = vsel %vm173, %v163, %v166
    %v186 = vsel %vm176, %v172, 1326507024
    %v187 = vsel %vm175, %v169, %v186
    %v188 = vsel %vm174, %v185, %v187
    %v189 = vshll.u32 %v149, 8
    %v190 = vand.u32 %v189, 65535
    %v191 = vshrl.u32 %v189, 16
    %v192 = vand.u32 %v188, 65535
    %v193 = vshrl.u32 %v188, 16
    %v194 = vmul.u32 %v190, %v192
    %v195 = vmul.u32 %v190, %v193
    %v196 = vmul.u32 %v191, %v192
    %v197 = vmul.u32 %v191, %v193
    %v198 = vshll.u32 %v195, 16
    %v199 = vshrl.u32 %v195, 16
    %v200 = vshll.u32 %v196, 16
    %v201 = vshrl.u32 %v196, 16
    %vm202 = vc.u32 %v194, %v198
    %v203 = vsel %vm202, 1, 0
    %v204 = vadd.s32 %v194, %v198
    %v205 = vadd.s32 %v197, %v203
    %vm206 = vc.u32 %v204, %v200
    %v207 = vsel %vm206, 1, 0
    %v208 = vadd.s32 %v204, %v200
    %v209 = vadd.s32 %v205, %v207
    %v210 = vadd.s32 %v209, %v199
    %v211 = vadd.s32 %v210, %v201
    %v212 = vand.u32 %v189, 65535
    %v213 = vshrl.u32 %v189, 16
    %v214 = vand.u32 %v184, 65535
    %v215 = vshrl.u32 %v184, 16
    %v216 = vmul.u32 %v212, %v214
    %v217 = vmul.u32 %v212, %v215
    %v218 = vmul.u32 %v213, %v214
    %v219 = vmul.u32 %v213, %v215
    %v220 = vshll.u32 %v217, 16
    %v221 = vshrl.u32 %v217, 16
    %v222 = vshll.u32 %v218, 16
    %v223 = vshrl.u32 %v218, 16
    %vm224 = vc.u32 %v216, %v220
    %v225 = vsel %vm224, 1, 0
    %v226 = vadd.s32 %v216, %v220
    %v227 = vadd.s32 %v219, %v225
    %vm228 = vc.u32 %v226, %v222
    %v229 = vsel %vm228, 1, 0
    %v230 = vadd.s32 %v226, %v222
    %v231 = vadd.s32 %v227, %v229
    %v232 = vadd.s32 %v231, %v221
    %v233 = vadd.s32 %v232, %v223
    %v234 = vmul.u32 %v189, %v180
    %v235 = vadd.s32 %v211, %v230
    %vm236 = vc.u32 %v211, %v230
    %v237 = vadd.s32 %v233, 1
    %v238 = vsel %vm236, %v237, %v233
    %v239 = vadd.s32 %v234, %v238
    %v240 = vadd.s32 %v239, 536870912
    %v241 = vshrl.u32 %v240, 30
    %v242 = vshll.u32 %v241, 30
    %v243 = vsub.s32 %v239, %v242
    %vm244 = vcmp.lt.s32.totalorder %v243, 0
    %v245 = vsub.s32 0, %v243
    %v246 = vsel %vm244, %v245, %v243
    %v247 = vclz %v246
    %v248 = vsub.s32 %v247, 2
    %vm249 = vcmp.gt.s32.totalorder 0, %v248
    %v250 = vsel %vm249, 0, %v248
    %v251 = vsub.s32 32, %v250
    %v252 = vshll.u32 %v243, %v250
    %v253 = vshrl.u32 %v235, %v251
    %v254 = vor.u32 %v252, %v253
    %v255 = vsub.s32 4294967266, %v250
    %v256 = vadd.s32 %v255, 127
    %v257 = vshll.u32 %v256, 23
    %v258 = vor.u32 4788187, %v257
    %v259 = vand.u32 2147483647, %v258
    %v261 = vcvt.s32.f32 %v254
    %v262 = vmul.f32 %v261, %v259
    %v263 = vxor.u32 %v262, 2147483648
    %v264 = vsel %vm143, %v263, %v262
    %v265 = vsub.s32 4, %v241
    %v266 = vsel %vm143, %v265, %v241
    %v267 = vsel %vm142, %v140, %v264
    %v268 = vsel %vm142, 0, %v266
    %v269 = vmul.f32 %v267, %v267
    %v270 = vmul.f32 %v269, -0.001358992
    %v271 = vadd.f32 %v270, 0.041655596
    %v272 = vmul.f32 %v269, %v271
    %v273 = vadd.f32 %v272, -0.4999988
    %v274 = vmul.f32 %v269, %v273
    %v275 = vadd.f32 1.0, %v274
    %v276 = vmul.f32 %v267, %v267
    %v277 = vmul.f32 %v276, -0.00019511016
    %v278 = vadd.f32 %v277, 0.008332121
    %v279 = vmul.f32 %v276, %v278
    %v280 = vadd.f32 %v279, -0.16666654
    %v281 = vmul.f32 %v276, %v280
    %v282 = vadd.f32 %v281, 1.0
    %v283 = vmul.f32 %v282, %v267
    %vm284 = vweird.f32 %v140
    %v285 = vadd.s32 %v268, 3
    %v286 = vand.u32 %v285, 3
    %vm287 = vcmp.lt.s32.totalorder %v286, 2
    %vm288 = vcmp.eq.s32.totalorder %v286, 0
    %v289 = vxor.u32 %v283, 2147483648
    %v290 = vsel %vm288, %v275, %v289
    %vm291 = vcmp.eq.s32.totalorder %v286, 2
    %v292 = vxor.u32 %v275, 2147483648
    %v293 = vsel %vm291, %v292, %v283
    %v294 = vsel %vm287, %v290, %v293
    %v295 = vsel %vm284, nan, %v294
    %v296 = vld [vmem:[#allocation2] sm:$0xf]
    %v297 = vmul.f32 %v296, 5.656854
    %v298 = vadd.f32 %v297, %v295
    %299 = vst [vmem:[#allocation10] sm:$0xf] %v298
    %v300 = vld [vmem:[#allocation5] sm:$0xf]
    %v301 = vmul.f32 %v300, 5.656854
    %v302 = vadd.f32 %v301, %v295
    %303 = vst [vmem:[#allocation11] sm:$0xf] %v302
    %v304 = vld [vmem:[#allocation7] sm:$0xf]
    %v305 = vmul.f32 %v304, 5.656854
    %v306 = vadd.f32 %v305, %v295
    %307 = vst [vmem:[#allocation13] sm:$0xf] %v306
    // Predicated region
    $region34: #{tpu_custom_call.1} parent=1 // pred_check
      _
    $region35: #{tpu_custom_call.1} parent=1 // pred_check_branch
      %309 = sbr.rel (0) target = $region37
    $region36: #{tpu_custom_call.1} parent=1 // pred_region
      %311 = vsyncadd [#allocation4], 0
      %s313 = sshll.u32 [#allocation10], 4
      %s314 = int_to_ptr.vmem [resolvable:$true] %s313
      %s315 = sshll.u32 %s4, 4
      %s316 = int_to_ptr.hbm [resolvable:$true] %s315
      %318 = dma.vmem_to_hbm [thread:$0]  %s314, 64, %s316, [#allocation4]
    $region37: #{tpu_custom_call.1} parent=1 // pred_fallthru
      _
    // Predicated region
    $region38: #{tpu_custom_call.1} parent=1 // pred_check
      _
    $region39: #{tpu_custom_call.1} parent=1 // pred_check_branch
      %320 = sbr.rel (0) target = $region41
    $region40: #{tpu_custom_call.1} parent=1 // pred_region
      %322 = vsyncadd [#allocation12], 0
      %s324 = sshll.u32 [#allocation11], 4
      %s325 = int_to_ptr.vmem [resolvable:$true] %s324
      %s326 = sshll.u32 %s5, 4
      %s327 = int_to_ptr.hbm [resolvable:$true] %s326
      %329 = dma.vmem_to_hbm [thread:$0]  %s325, 64, %s327, [#allocation12]
    $region41: #{tpu_custom_call.1} parent=1 // pred_fallthru
      _
    // Predicated region
    $region42: #{tpu_custom_call.1} parent=1 // pred_check
      _
    $region43: #{tpu_custom_call.1} parent=1 // pred_check_branch
      %331 = sbr.rel (0) target = $region45
    $region44: #{tpu_custom_call.1} parent=1 // pred_region
      %333 = vsyncadd [#allocation12], 0
      %s335 = sshll.u32 [#allocation13], 4
      %s336 = int_to_ptr.vmem [resolvable:$true] %s335
      %s337 = sshll.u32 %s6, 4
      %s338 = int_to_ptr.hbm [resolvable:$true] %s337
      %340 = dma.vmem_to_hbm [thread:$0]  %s336, 64, %s338, [#allocation12]
    $region45: #{tpu_custom_call.1} parent=1 // pred_fallthru
      _
    // Predicated region
    $region46: #{tpu_custom_call.1} parent=1 // pred_check
      _
    $region47: #{tpu_custom_call.1} parent=1 // pred_check_branch
      %342 = sbr.rel (0) target = $region49
    $region48: #{tpu_custom_call.1} parent=1 // pred_region
      %344 = dma.done [#allocation4], 64
    $region49: #{tpu_custom_call.1} parent=1 // pred_fallthru
      _
    // Predicated region
    $region50: #{tpu_custom_call.1} parent=1 // pred_check
      _
    $region51: #{tpu_custom_call.1} parent=1 // pred_check_branch
      %346 = sbr.rel (0) target = $region53
    $region52: #{tpu_custom_call.1} parent=1 // pred_region
      %348 = dma.done [#allocation12], 64
    $region53: #{tpu_custom_call.1} parent=1 // pred_fallthru
      _
    // Predicated region
    $region54: #{tpu_custom_call.1} parent=1 // pred_check
      _
    $region55: #{tpu_custom_call.1} parent=1 // pred_check_branch
      %350 = sbr.rel (0) target = $region57
    $region56: #{tpu_custom_call.1} parent=1 // pred_region
      %352 = dma.done [#allocation12], 64
    $region57: #{tpu_custom_call.1} parent=1 // pred_fallthru
      _
    %353 = vsyncpa [#allocation3], 1
    %354 = vsyncpa [#allocation6], 1
    %355 = vsyncpa [#allocation9], 1
    %356 = vsyncpa [#allocation4], 1
    %357 = vsyncpa [#allocation12], 1

</llo_original>
